<compile_context>
chip_gen: v7x
topology: tpu7x:2x2x1
jax: 0.10.0
libtpu: 0.0.40
codegen_flags: <defaults>
</compile_context>

<pallas_src>
import functools

import numpy as np
import jax
import jax.numpy as jnp
from jax.experimental import pallas as pl
from jax.experimental.pallas import tpu as pltpu

EPS = float(np.finfo(np.float32).eps)   # torch.finfo(torch.float32).eps
EPS2 = EPS * EPS
INV_EPS2 = 1.0 / EPS2                   # constant multiply instead of divide


def dtopk_kernel(x_ref, o_ref, *, num, largest):
    x = x_ref[...].astype(jnp.float32)              # (TB, N); bf16 cast on VPU
    TB, N = x.shape
    col = jax.lax.broadcasted_iota(jnp.int32, (TB, N), 1)
    fill = jnp.float32(-jnp.inf) if largest else jnp.float32(jnp.inf)

    # Single fused, unrolled loop over k: extract the k-th extreme, compute and
    # store its lane-dense (TB, N) soft mask, then mask the first occurrence
    # out of `work`.  Interleaving XLU reductions, VPU elementwise and the
    # dense vst lets the LLO scheduler co-issue across slots.
    work = x
    for k in range(num):
        if largest:
            v = jnp.max(work, axis=1, keepdims=True)        # (TB, 1)
        else:
            v = jnp.min(work, axis=1, keepdims=True)

        # Soft membership mask (same math as the torch forward):
        #   x_m = relu(eps^2 - (x - v)^2) / eps^2
        #   out = relu(x_m + (1 - sum_N(x_m)))        (1 - s folded per row)
        d = x - v
        x_m = jnp.maximum(EPS2 - d * d, 0.0) * INV_EPS2
        c = 1.0 - jnp.sum(x_m, axis=1, keepdims=True)        # (TB, 1)
        o_ref[k] = jnp.maximum(x_m + c, 0.0)                 # dense (TB, N) store

        # Mask exactly the FIRST occurrence of v (torch.topk duplicate
        # semantics).  Skipped for the last k.  (Lane-axis jnp.argmax is not
        # guaranteed to lower in Mosaic, so the min-of-index reduce is kept.)
        if k + 1 < num:
            idxs = jnp.where(work == v, col, N)
            fi = jnp.min(idxs, axis=1, keepdims=True)
            work = jnp.where(idxs == fi, fill, work)


def _round_up(a, m):
    return ((a + m - 1) // m) * m


def _vmem_capacity_bytes():
    try:
        cap = getattr(pltpu.get_tpu_info(), "vmem_capacity_bytes", None)
        if cap:
            return int(cap)
    except Exception:
        pass
    return 64 << 20          # conservative (v7x-sized) fallback


def dtopk_kbn(x, num, largest=True, sort=True, tb=None):
    """Kernel-native layout: returns (num, B, N).

    Prefer this entry point when the consumer can index the leading k axis
    directly -- it avoids an extra full HBM read+write pass to transpose the
    dominant (num*B*N) output stream into the torch layout.
    """
    B, N = x.shape
    if num > N:
        raise ValueError(f"num={num} > N={N} (torch.topk would raise)")
    if x.dtype not in (jnp.float32, jnp.bfloat16):
        x = x.astype(jnp.float32)
    align = 8 if x.dtype == jnp.float32 else 16

    # Per-generation tile budget: grow on v5e/v6e (128 MiB physical VMEM),
    # stay conservative on v7x (64 MiB per TensorCore).
    if _vmem_capacity_bytes() >= (100 << 20):
        step_budget, vmem_limit = 14 << 20, 64 << 20
    else:
        step_budget, vmem_limit = 6 << 20, 40 << 20

    if B <= align:
        tb, b_pad = B, B                      # block == full array dims
    else:
        if tb is None:
            # bytes/row/step: double-buffered input + (num,TB,N) f32 output,
            # plus a few compiler-materialized full-tile temporaries.
            per_row = 4 * N * (2 * num + 8)
            tb_budget = step_budget // max(per_row, 1)
            # Never collapse to one grid step: aim for >= ~8 tiles so v7x
            # megacore sharding and DMA/compute overlap stay engaged.
            tb = max(align, min(tb_budget, pl.cdiv(B, 8), 1024))
        tb = max(align, (int(tb) // align) * align)
        if tb >= B:
            tb, b_pad = B, B
        else:
            n_tiles = pl.cdiv(B, tb)
            tb = _round_up(pl.cdiv(B, n_tiles), align)   # balance tile sizes
            b_pad = n_tiles * tb

    xp = x if b_pad == B else jnp.pad(x, ((0, b_pad - B), (0, 0)))
    # TODO(synk): handle the ragged last batch tile in-kernel (masked tail)
    # instead of jnp.pad + slice; low priority per the perf review.

    kernel = functools.partial(dtopk_kernel, num=num, largest=largest)
    out = pl.pallas_call(
        kernel,
        out_shape=jax.ShapeDtypeStruct((num, b_pad, N), jnp.float32),
        grid=(b_pad // tb,),
        in_specs=[pl.BlockSpec((tb, N), lambda i: (i, 0))],
        out_specs=pl.BlockSpec((num, tb, N), lambda i: (0, i, 0)),
        compiler_params=pltpu.CompilerParams(
            dimension_semantics=("parallel",),    # rows independent -> megacore
            vmem_limit_bytes=vmem_limit),
    )(xp)

    if b_pad != B:
        out = out[:, :B]
    return out


def dtopk(x, num, largest=True, sort=True, tb=None):
    """Torch-layout compatibility wrapper: returns (B, N, num), exactly like
    the original nn.Module (sort=True ordering; sort=False in torch only means
    'unspecified order', so sorted output remains valid).  Costs one extra XLA
    transpose pass over the output; use dtopk_kbn() when possible."""
    return jnp.transpose(dtopk_kbn(x, num, largest, sort, tb), (1, 2, 0))


def dtopk_ref(x, num, largest=True):
    # Pure-JAX reference for correctness checking (torch layout (B, N, num)).
    t = jax.lax.top_k(x if largest else -x, num)[0]
    if not largest:
        t = -t
    xx = x[:, :, None]
    tt = t[:, None, :]
    x_m = jnp.maximum(-(xx - tt) ** 2 + EPS2, 0.0) / EPS2
    s = jnp.sum(x_m, axis=1, keepdims=True)
    return jnp.maximum(x_m - s + 1.0, 0.0)


if __name__ == "__main__":
    key = jax.random.PRNGKey(0)

    # 1) Small canonical case (single tile), torch layout.
    B, N, num = 2, 16, 4
    x = jax.random.normal(key, (B, N), dtype=jnp.float32)
    out = dtopk(x, num, largest=True, sort=True)
    jax.block_until_ready(out)
    ref = dtopk_ref(x, num, largest=True)
    np.testing.assert_allclose(np.asarray(out), np.asarray(ref), atol=1e-6)

    # largest=False path.
    out_s = dtopk(x, num, largest=False)
    jax.block_until_ready(out_s)
    np.testing.assert_allclose(np.asarray(out_s),
                               np.asarray(dtopk_ref(x, num, largest=False)),
                               atol=1e-6)

    # 2) Kernel-native (num, B, N) layout (no output-transpose pass).
    out_kbn = dtopk_kbn(x, num, largest=True)
    jax.block_until_ready(out_kbn)
    np.testing.assert_allclose(np.asarray(out_kbn),
                               np.asarray(jnp.transpose(ref, (2, 0, 1))),
                               atol=1e-6)

    # 3) Batch-tiled path with explicit tb: 20 rows -> pad to 24, 3 tiles.
    B2, N2, num2 = 20, 128, 3
    x2 = jax.random.normal(jax.random.PRNGKey(1), (B2, N2), dtype=jnp.float32)
    out2 = dtopk(x2, num2, largest=True, tb=8)
    jax.block_until_ready(out2)
    np.testing.assert_allclose(np.asarray(out2),
                               np.asarray(dtopk_ref(x2, num2, largest=True)),
                               atol=1e-6)

    # 4) Auto tile selection with B > 8 (multi-step grid, never single-tile).
    B3, N3, num3 = 40, 256, 2
    x3 = jax.random.normal(jax.random.PRNGKey(2), (B3, N3), dtype=jnp.float32)
    out3 = dtopk(x3, num3, largest=True)
    jax.block_until_ready(out3)
    np.testing.assert_allclose(np.asarray(out3),
                               np.asarray(dtopk_ref(x3, num3, largest=True)),
                               atol=1e-6)

    # 5) bf16 input stays bf16 on the HBM->VMEM path (cast inside the kernel).
    x4 = jax.random.normal(jax.random.PRNGKey(3), (4, 128),
                           dtype=jnp.float32).astype(jnp.bfloat16)
    out4 = dtopk(x4, 3, largest=True)
    jax.block_until_ready(out4)
    np.testing.assert_allclose(np.asarray(out4),
                               np.asarray(dtopk_ref(x4.astype(jnp.float32), 3)),
                               atol=1e-6)

    print("KERNEL_OK")
</pallas_src>

<mosaic_0001>
module attributes {stable_mosaic.version = 11 : i64} {
  func.func @dtopk_kernel(%arg0: i32, %arg1: memref<2x16xf32, #tpu.memory_space<vmem>>, %arg2: memref<4x2x16xf32, #tpu.memory_space<vmem>>) attributes {dimension_semantics = [#tpu.dimension_semantics<parallel>], iteration_bounds = array<i64: 1>, scalar_prefetch = 0 : i64, scratch_operands = 0 : i64, tpu.core_type = #tpu.core_type<tc>, window_params = [{transform_indices = @transform_0, window_bounds = array<i64: 2, 16>}, {transform_indices = @transform_1, window_bounds = array<i64: 4, 2, 16>}]} {
    %c0 = arith.constant 0 : index
    %c0_0 = arith.constant 0 : index
    %0 = vector.load %arg1[%c0, %c0_0] : memref<2x16xf32, #tpu.memory_space<vmem>>, vector<2x16xf32>
    %1 = tpu.iota {dimensions = array<i32: 1>} : vector<2x16xi32>
    %cst = arith.constant dense<0xFF800000> : vector<2xf32>
    %2 = vector.multi_reduction <maximumf>, %0, %cst [1] : vector<2x16xf32> to vector<2xf32>
    %3 = vector.shape_cast %2 : vector<2xf32> to vector<2x1xf32>
    %4 = vector.broadcast %3 : vector<2x1xf32> to vector<2x16xf32>
    %5 = arith.subf %0, %4 : vector<2x16xf32>
    %6 = arith.mulf %5, %5 : vector<2x16xf32>
    %cst_1 = arith.constant 1.42108547E-14 : f32
    %7 = vector.broadcast %cst_1 : f32 to vector<2x16xf32>
    %8 = arith.subf %7, %6 : vector<2x16xf32>
    %cst_2 = arith.constant 0.000000e+00 : f32
    %9 = vector.broadcast %cst_2 : f32 to vector<2x16xf32>
    %10 = arith.maximumf %8, %9 : vector<2x16xf32>
    %cst_3 = arith.constant 7.03687441E+13 : f32
    %11 = vector.broadcast %cst_3 : f32 to vector<2x16xf32>
    %12 = arith.mulf %10, %11 : vector<2x16xf32>
    %cst_4 = arith.constant dense<0.000000e+00> : vector<2xf32>
    %13 = vector.multi_reduction <add>, %12, %cst_4 [1] : vector<2x16xf32> to vector<2xf32>
    %14 = vector.shape_cast %13 : vector<2xf32> to vector<2x1xf32>
    %cst_5 = arith.constant 1.000000e+00 : f32
    %15 = vector.broadcast %cst_5 : f32 to vector<2x1xf32>
    %16 = arith.subf %15, %14 : vector<2x1xf32>
    %17 = vector.broadcast %16 : vector<2x1xf32> to vector<2x16xf32>
    %18 = arith.addf %12, %17 : vector<2x16xf32>
    %cst_6 = arith.constant 0.000000e+00 : f32
    %19 = vector.broadcast %cst_6 : f32 to vector<2x16xf32>
    %20 = arith.maximumf %18, %19 : vector<2x16xf32>
    %c0_7 = arith.constant 0 : index
    %c0_8 = arith.constant 0 : index
    %c0_9 = arith.constant 0 : index
    %21 = vector.load %arg2[%c0_7, %c0_8, %c0_9] : memref<4x2x16xf32, #tpu.memory_space<vmem>>, vector<1x2x16xf32>
    %22 = vector.shape_cast %21 : vector<1x2x16xf32> to vector<2x16xf32>
    %23 = vector.shape_cast %20 : vector<2x16xf32> to vector<1x2x16xf32>
    tpu.vector_store %arg2[%c0_7, %c0_8, %c0_9], %23 {strides = array<i32>} : memref<4x2x16xf32, #tpu.memory_space<vmem>>, vector<1x2x16xf32>,
    %24 = vector.broadcast %3 : vector<2x1xf32> to vector<2x16xf32>
    %25 = arith.cmpf oeq, %0, %24 : vector<2x16xf32>
    %c16_i32 = arith.constant 16 : i32
    %26 = vector.broadcast %c16_i32 : i32 to vector<2x16xi32>
    %27 = arith.select %25, %1, %26 : vector<2x16xi1>, vector<2x16xi32>
    %cst_10 = arith.constant dense<2147483647> : vector<2xi32>
    %28 = vector.multi_reduction <minsi>, %27, %cst_10 [1] : vector<2x16xi32> to vector<2xi32>
    %29 = vector.shape_cast %28 : vector<2xi32> to vector<2x1xi32>
    %30 = vector.broadcast %29 : vector<2x1xi32> to vector<2x16xi32>
    %31 = arith.cmpi eq, %27, %30 : vector<2x16xi32>
    %cst_11 = arith.constant 0xFF800000 : f32
    %32 = vector.broadcast %cst_11 : f32 to vector<2x16xf32>
    %33 = arith.select %31, %32, %0 : vector<2x16xi1>, vector<2x16xf32>
    %cst_12 = arith.constant dense<0xFF800000> : vector<2xf32>
    %34 = vector.multi_reduction <maximumf>, %33, %cst_12 [1] : vector<2x16xf32> to vector<2xf32>
    %35 = vector.shape_cast %34 : vector<2xf32> to vector<2x1xf32>
    %36 = vector.broadcast %35 : vector<2x1xf32> to vector<2x16xf32>
    %37 = arith.subf %0, %36 : vector<2x16xf32>
    %38 = arith.mulf %37, %37 : vector<2x16xf32>
    %cst_13 = arith.constant 1.42108547E-14 : f32
    %39 = vector.broadcast %cst_13 : f32 to vector<2x16xf32>
    %40 = arith.subf %39, %38 : vector<2x16xf32>
    %cst_14 = arith.constant 0.000000e+00 : f32
    %41 = vector.broadcast %cst_14 : f32 to vector<2x16xf32>
    %42 = arith.maximumf %40, %41 : vector<2x16xf32>
    %cst_15 = arith.constant 7.03687441E+13 : f32
    %43 = vector.broadcast %cst_15 : f32 to vector<2x16xf32>
    %44 = arith.mulf %42, %43 : vector<2x16xf32>
    %cst_16 = arith.constant dense<0.000000e+00> : vector<2xf32>
    %45 = vector.multi_reduction <add>, %44, %cst_16 [1] : vector<2x16xf32> to vector<2xf32>
    %46 = vector.shape_cast %45 : vector<2xf32> to vector<2x1xf32>
    %cst_17 = arith.constant 1.000000e+00 : f32
    %47 = vector.broadcast %cst_17 : f32 to vector<2x1xf32>
    %48 = arith.subf %47, %46 : vector<2x1xf32>
    %49 = vector.broadcast %48 : vector<2x1xf32> to vector<2x16xf32>
    %50 = arith.addf %44, %49 : vector<2x16xf32>
    %cst_18 = arith.constant 0.000000e+00 : f32
    %51 = vector.broadcast %cst_18 : f32 to vector<2x16xf32>
    %52 = arith.maximumf %50, %51 : vector<2x16xf32>
    %c1 = arith.constant 1 : index
    %c0_19 = arith.constant 0 : index
    %c0_20 = arith.constant 0 : index
    %53 = vector.load %arg2[%c1, %c0_19, %c0_20] : memref<4x2x16xf32, #tpu.memory_space<vmem>>, vector<1x2x16xf32>
    %54 = vector.shape_cast %53 : vector<1x2x16xf32> to vector<2x16xf32>
    %55 = vector.shape_cast %52 : vector<2x16xf32> to vector<1x2x16xf32>
    tpu.vector_store %arg2[%c1, %c0_19, %c0_20], %55 {strides = array<i32>} : memref<4x2x16xf32, #tpu.memory_space<vmem>>, vector<1x2x16xf32>,
    %56 = vector.broadcast %35 : vector<2x1xf32> to vector<2x16xf32>
    %57 = arith.cmpf oeq, %33, %56 : vector<2x16xf32>
    %c16_i32_21 = arith.constant 16 : i32
    %58 = vector.broadcast %c16_i32_21 : i32 to vector<2x16xi32>
    %59 = arith.select %57, %1, %58 : vector<2x16xi1>, vector<2x16xi32>
    %cst_22 = arith.constant dense<2147483647> : vector<2xi32>
    %60 = vector.multi_reduction <minsi>, %59, %cst_22 [1] : vector<2x16xi32> to vector<2xi32>
    %61 = vector.shape_cast %60 : vector<2xi32> to vector<2x1xi32>
    %62 = vector.broadcast %61 : vector<2x1xi32> to vector<2x16xi32>
    %63 = arith.cmpi eq, %59, %62 : vector<2x16xi32>
    %cst_23 = arith.constant 0xFF800000 : f32
    %64 = vector.broadcast %cst_23 : f32 to vector<2x16xf32>
    %65 = arith.select %63, %64, %33 : vector<2x16xi1>, vector<2x16xf32>
    %cst_24 = arith.constant dense<0xFF800000> : vector<2xf32>
    %66 = vector.multi_reduction <maximumf>, %65, %cst_24 [1] : vector<2x16xf32> to vector<2xf32>
    %67 = vector.shape_cast %66 : vector<2xf32> to vector<2x1xf32>
    %68 = vector.broadcast %67 : vector<2x1xf32> to vector<2x16xf32>
    %69 = arith.subf %0, %68 : vector<2x16xf32>
    %70 = arith.mulf %69, %69 : vector<2x16xf32>
    %cst_25 = arith.constant 1.42108547E-14 : f32
    %71 = vector.broadcast %cst_25 : f32 to vector<2x16xf32>
    %72 = arith.subf %71, %70 : vector<2x16xf32>
    %cst_26 = arith.constant 0.000000e+00 : f32
    %73 = vector.broadcast %cst_26 : f32 to vector<2x16xf32>
    %74 = arith.maximumf %72, %73 : vector<2x16xf32>
    %cst_27 = arith.constant 7.03687441E+13 : f32
    %75 = vector.broadcast %cst_27 : f32 to vector<2x16xf32>
    %76 = arith.mulf %74, %75 : vector<2x16xf32>
    %cst_28 = arith.constant dense<0.000000e+00> : vector<2xf32>
    %77 = vector.multi_reduction <add>, %76, %cst_28 [1] : vector<2x16xf32> to vector<2xf32>
    %78 = vector.shape_cast %77 : vector<2xf32> to vector<2x1xf32>
    %cst_29 = arith.constant 1.000000e+00 : f32
    %79 = vector.broadcast %cst_29 : f32 to vector<2x1xf32>
    %80 = arith.subf %79, %78 : vector<2x1xf32>
    %81 = vector.broadcast %80 : vector<2x1xf32> to vector<2x16xf32>
    %82 = arith.addf %76, %81 : vector<2x16xf32>
    %cst_30 = arith.constant 0.000000e+00 : f32
    %83 = vector.broadcast %cst_30 : f32 to vector<2x16xf32>
    %84 = arith.maximumf %82, %83 : vector<2x16xf32>
    %c2 = arith.constant 2 : index
    %c0_31 = arith.constant 0 : index
    %c0_32 = arith.constant 0 : index
    %85 = vector.load %arg2[%c2, %c0_31, %c0_32] : memref<4x2x16xf32, #tpu.memory_space<vmem>>, vector<1x2x16xf32>
    %86 = vector.shape_cast %85 : vector<1x2x16xf32> to vector<2x16xf32>
    %87 = vector.shape_cast %84 : vector<2x16xf32> to vector<1x2x16xf32>
    tpu.vector_store %arg2[%c2, %c0_31, %c0_32], %87 {strides = array<i32>} : memref<4x2x16xf32, #tpu.memory_space<vmem>>, vector<1x2x16xf32>,
    %88 = vector.broadcast %67 : vector<2x1xf32> to vector<2x16xf32>
    %89 = arith.cmpf oeq, %65, %88 : vector<2x16xf32>
    %c16_i32_33 = arith.constant 16 : i32
    %90 = vector.broadcast %c16_i32_33 : i32 to vector<2x16xi32>
    %91 = arith.select %89, %1, %90 : vector<2x16xi1>, vector<2x16xi32>
    %cst_34 = arith.constant dense<2147483647> : vector<2xi32>
    %92 = vector.multi_reduction <minsi>, %91, %cst_34 [1] : vector<2x16xi32> to vector<2xi32>
    %93 = vector.shape_cast %92 : vector<2xi32> to vector<2x1xi32>
    %94 = vector.broadcast %93 : vector<2x1xi32> to vector<2x16xi32>
    %95 = arith.cmpi eq, %91, %94 : vector<2x16xi32>
    %cst_35 = arith.constant 0xFF800000 : f32
    %96 = vector.broadcast %cst_35 : f32 to vector<2x16xf32>
    %97 = arith.select %95, %96, %65 : vector<2x16xi1>, vector<2x16xf32>
    %cst_36 = arith.constant dense<0xFF800000> : vector<2xf32>
    %98 = vector.multi_reduction <maximumf>, %97, %cst_36 [1] : vector<2x16xf32> to vector<2xf32>
    %99 = vector.shape_cast %98 : vector<2xf32> to vector<2x1xf32>
    %100 = vector.broadcast %99 : vector<2x1xf32> to vector<2x16xf32>
    %101 = arith.subf %0, %100 : vector<2x16xf32>
    %102 = arith.mulf %101, %101 : vector<2x16xf32>
    %cst_37 = arith.constant 1.42108547E-14 : f32
    %103 = vector.broadcast %cst_37 : f32 to vector<2x16xf32>
    %104 = arith.subf %103, %102 : vector<2x16xf32>
    %cst_38 = arith.constant 0.000000e+00 : f32
    %105 = vector.broadcast %cst_38 : f32 to vector<2x16xf32>
    %106 = arith.maximumf %104, %105 : vector<2x16xf32>
    %cst_39 = arith.constant 7.03687441E+13 : f32
    %107 = vector.broadcast %cst_39 : f32 to vector<2x16xf32>
    %108 = arith.mulf %106, %107 : vector<2x16xf32>
    %cst_40 = arith.constant dense<0.000000e+00> : vector<2xf32>
    %109 = vector.multi_reduction <add>, %108, %cst_40 [1] : vector<2x16xf32> to vector<2xf32>
    %110 = vector.shape_cast %109 : vector<2xf32> to vector<2x1xf32>
    %cst_41 = arith.constant 1.000000e+00 : f32
    %111 = vector.broadcast %cst_41 : f32 to vector<2x1xf32>
    %112 = arith.subf %111, %110 : vector<2x1xf32>
    %113 = vector.broadcast %112 : vector<2x1xf32> to vector<2x16xf32>
    %114 = arith.addf %108, %113 : vector<2x16xf32>
    %cst_42 = arith.constant 0.000000e+00 : f32
    %115 = vector.broadcast %cst_42 : f32 to vector<2x16xf32>
    %116 = arith.maximumf %114, %115 : vector<2x16xf32>
    %c3 = arith.constant 3 : index
    %c0_43 = arith.constant 0 : index
    %c0_44 = arith.constant 0 : index
    %117 = vector.load %arg2[%c3, %c0_43, %c0_44] : memref<4x2x16xf32, #tpu.memory_space<vmem>>, vector<1x2x16xf32>
    %118 = vector.shape_cast %117 : vector<1x2x16xf32> to vector<2x16xf32>
    %119 = vector.shape_cast %116 : vector<2x16xf32> to vector<1x2x16xf32>
    tpu.vector_store %arg2[%c3, %c0_43, %c0_44], %119 {strides = array<i32>} : memref<4x2x16xf32, #tpu.memory_space<vmem>>, vector<1x2x16xf32>,
    return
  }
  func.func @transform_0(%arg0: i32) -> (i32, i32) {
    %c0_i32 = arith.constant 0 : i32
    %c0_i32_0 = arith.constant 0 : i32
    return %arg0, %c0_i32 : i32, i32
  }
  func.func @transform_1(%arg0: i32) -> (i32, i32, i32) {
    %c0_i32 = arith.constant 0 : i32
    %c0_i32_0 = arith.constant 0 : i32
    %c0_i32_1 = arith.constant 0 : i32
    return %c0_i32, %arg0, %c0_i32_0 : i32, i32, i32
  }
}

</mosaic_0001>

<llo_original>
// kernel: tpu_custom_call.1
$region0: #{tpu_custom_call.1}
  #allocation0 [shape = 'u32[]', space=smem, size = 0x4, offset = 0x4, fixed_abs, tag = 'smem constant byte address 0x4 - core index']
  #allocation1 [shape = 'u32[144,128]{1,0:T(1,128)}', space=vmem, size = 0x12000, scoped, tag = 'internal scratch']
  %s0 = inlined_call_operand.hbm [shape: f32[2,16], index: 0, kind: input, shape index: {}]
  %s1 = inlined_call_operand.hbm [shape: f32[4,2,16], index: 1, kind: output, shape index: {}]
  %s2 = sld [smem:[#allocation0]]
  $region18: #{tpu_custom_call.1} parent=0
    _
  %s4 = ssub.s32 1, %s2
  %s5 = scalar_select 0, %s4, %s2
  $region1: #{tpu_custom_call.1} parent=0
    #allocation2 [shape = 'u8[1024]{0}', space=vmem, size = 0x400, scoped, tag = 'input window, operand 0, single buffered']
    #allocation3 [shape = 's32[1]{0}', space=sflag, size = 0x4, scoped, tag = 'scoped memory for tpu_custom_call.1']
    #allocation4 [shape = 's32[1]{0}', space=sflag, size = 0x4, scoped, tag = 'scoped memory for tpu_custom_call.1']
    #allocation5 [shape = 'u8[4096]{0}', space=vmem, size = 0x1000, scoped, tag = 'output window, operand 0, single buffered']
    %6 = vsyncpa [#allocation3], 0
    %7 = vsyncpa [#allocation4], 0
    // Predicated region
    $region2: #{tpu_custom_call.1} parent=1 // pred_check
      _
    $region3: #{tpu_custom_call.1} parent=1 // pred_check_branch
      %9 = sbr.rel (0) target = $region5
    $region4: #{tpu_custom_call.1} parent=1 // pred_region
      %s11 = ssub.s32 32, 32
      %12 = vsyncadd [#allocation3], %s11
      %s14 = sshll.u32 [#allocation2], 4
      %s15 = int_to_ptr.vmem [resolvable:$true] %s14
      %17 = dma.hbm_to_vmem [thread:$0]  %s0, 32, %s15, [#allocation3]
    $region5: #{tpu_custom_call.1} parent=1 // pred_fallthru
      _
    // Predicated region
    $region6: #{tpu_custom_call.1} parent=1 // pred_check
      _
    $region7: #{tpu_custom_call.1} parent=1 // pred_check_branch
      %19 = sbr.rel (0) target = $region9
    $region8: #{tpu_custom_call.1} parent=1 // pred_region
      %20 = dma.done [#allocation3], 32
    $region9: #{tpu_custom_call.1} parent=1 // pred_fallthru
      _
    %v21 = vld [vmem:[#allocation2] sm:$0x3]
    %v22 = vlaneseq
    %v23 = vand.u32 %v22, 127
    %vm24 = vcmask 123904
    %v25 = vsel %vm24, %v21, -inf
    %26 = vmax.xlane.f32.xlu0 %v25
    %v27 = vpop.xlane.xlu0 %26
    %v28 = vsub.f32 %v21, %v27
    %v29 = vmul.f32 %v28, %v28
    %v30 = vsub.f32 1.4210855e-14, %v29
    %v31 = vmax.f32 %v30, 0.0
    %v32 = vmul.f32 %v31, 7.0368744e+13
    %v33 = vsel %vm24, %v32, 0.0
    %34 = vadd.xlane.f32.xlu0 %v33
    %v35 = vpop.xlane.xlu0 %34
    %v36 = vsub.f32 1.0, %v35
    %v37 = vadd.f32 %v32, %v36
    %v38 = vmax.f32 %v37, 0.0
    %39 = vst.msk [vmem:[#allocation5] sm:$0x3] %vm24, %v38
    %vm40 = vcmp.eq.f32.partialorder %v21, %v27
    %v41 = vsel %vm40, %v23, 16
    %v42 = vsel %vm24, %v41, 2147483647
    %v43 = vand.u32 %v42, 65535
    %v44 = vshra.s32 %v42, 16
    %v45 = vcvt.s32.f32 %v43
    %v46 = vcvt.s32.f32 %v44
    %47 = vmin.xlane.f32.xlu0 %v46
    %v48 = vpop.xlane.xlu0 %47
    %vm49 = vcmp.eq.f32.partialorder %v46, %v48
    %v50 = vsel %vm49, %v45, inf
    %51 = vmin.xlane.f32.xlu0 %v50
    %v52 = vpop.xlane.xlu0 %51
    %v53 = vcvt.f32.s32 %v52
    %v54 = vcvt.f32.s32 %v48
    %v55 = vshll.u32 %v54, 16
    %v56 = vadd.s32 %v55, %v53
    %vm57 = vcmp.eq.s32.totalorder %v41, %v56
    %v58 = vsel %vm57, -inf, %v21
    %v59 = vsel %vm24, %v58, -inf
    %60 = vmax.xlane.f32.xlu0 %v59
    %v61 = vpop.xlane.xlu0 %60
    %v62 = vsub.f32 %v21, %v61
    %v63 = vmul.f32 %v62, %v62
    %v64 = vsub.f32 1.4210855e-14, %v63
    %v65 = vmax.f32 %v64, 0.0
    %v66 = vmul.f32 %v65, 7.0368744e+13
    %v67 = vsel %vm24, %v66, 0.0
    %68 = vadd.xlane.f32.xlu0 %v67
    %v69 = vpop.xlane.xlu0 %68
    %v70 = vsub.f32 1.0, %v69
    %v71 = vadd.f32 %v66, %v70
    %v72 = vmax.f32 %v71, 0.0
    %s73 = scalar_lea.vmem [#allocation5], 2
    %74 = vst.msk [vmem:[%s73] sm:$0x3] %vm24, %v72
    %vm75 = vcmp.eq.f32.partialorder %v58, %v61
    %v76 = vsel %vm75, %v23, 16
    %v77 = vsel %vm24, %v76, 2147483647
    %v78 = vand.u32 %v77, 65535
    %v79 = vshra.s32 %v77, 16
    %v80 = vcvt.s32.f32 %v78
    %v81 = vcvt.s32.f32 %v79
    %82 = vmin.xlane.f32.xlu0 %v81
    %v83 = vpop.xlane.xlu0 %82
    %vm84 = vcmp.eq.f32.partialorder %v81, %v83
    %v85 = vsel %vm84, %v80, inf
    %86 = vmin.xlane.f32.xlu0 %v85
    %v87 = vpop.xlane.xlu0 %86
    %v88 = vcvt.f32.s32 %v87
    %v89 = vcvt.f32.s32 %v83
    %v90 = vshll.u32 %v89, 16
    %v91 = vadd.s32 %v90, %v88
    %vm92 = vcmp.eq.s32.totalorder %v76, %v91
    %v93 = vsel %vm92, -inf, %v58
    %v94 = vsel %vm24, %v93, -inf
    %95 = vmax.xlane.f32.xlu0 %v94
    %v96 = vpop.xlane.xlu0 %95
    %v97 = vsub.f32 %v21, %v96
    %v98 = vmul.f32 %v97, %v97
    %v99 = vsub.f32 1.4210855e-14, %v98
    %v100 = vmax.f32 %v99, 0.0
    %v101 = vmul.f32 %v100, 7.0368744e+13
    %v102 = vsel %vm24, %v101, 0.0
    %103 = vadd.xlane.f32.xlu0 %v102
    %v104 = vpop.xlane.xlu0 %103
    %v105 = vsub.f32 1.0, %v104
    %v106 = vadd.f32 %v101, %v105
    %v107 = vmax.f32 %v106, 0.0
    %s108 = scalar_lea.vmem [#allocation5], 4
    %109 = vst.msk [vmem:[%s108] sm:$0x3] %vm24, %v107
    %vm110 = vcmp.eq.f32.partialorder %v93, %v96
    %v111 = vsel %vm110, %v23, 16
    %v112 = vsel %vm24, %v111, 2147483647
    %v113 = vand.u32 %v112, 65535
    %v114 = vshra.s32 %v112, 16
    %v115 = vcvt.s32.f32 %v113
    %v116 = vcvt.s32.f32 %v114
    %117 = vmin.xlane.f32.xlu0 %v116
    %v118 = vpop.xlane.xlu0 %117
    %vm119 = vcmp.eq.f32.partialorder %v116, %v118
    %v120 = vsel %vm119, %v115, inf
    %121 = vmin.xlane.f32.xlu0 %v120
    %v122 = vpop.xlane.xlu0 %121
    %v123 = vcvt.f32.s32 %v122
    %v124 = vcvt.f32.s32 %v118
    %v125 = vshll.u32 %v124, 16
    %v126 = vadd.s32 %v125, %v123
    %vm127 = vcmp.eq.s32.totalorder %v111, %v126
    %v128 = vsel %vm127, -inf, %v93
    %v129 = vsel %vm24, %v128, -inf
    %130 = vmax.xlane.f32.xlu0 %v129
    %v131 = vpop.xlane.xlu0 %130
    %v132 = vsub.f32 %v21, %v131
    %v133 = vmul.f32 %v132, %v132
    %v134 = vsub.f32 1.4210855e-14, %v133
    %v135 = vmax.f32 %v134, 0.0
    %v136 = vmul.f32 %v135, 7.0368744e+13
    %v137 = vsel %vm24, %v136, 0.0
    %138 = vadd.xlane.f32.xlu0 %v137
    %v139 = vpop.xlane.xlu0 %138
    %v140 = vsub.f32 1.0, %v139
    %v141 = vadd.f32 %v136, %v140
    %v142 = vmax.f32 %v141, 0.0
    %s143 = scalar_lea.vmem [#allocation5], 6
    %144 = vst.msk [vmem:[%s143] sm:$0x3] %vm24, %v142
    // Predicated region
    $region10: #{tpu_custom_call.1} parent=1 // pred_check
      _
    $region11: #{tpu_custom_call.1} parent=1 // pred_check_branch
      %146 = sbr.rel (0) target = $region13
    $region12: #{tpu_custom_call.1} parent=1 // pred_region
      %s148 = ssub.s32 128, 128
      %149 = vsyncadd [#allocation4], %s148
      %s150 = sshll.u32 [#allocation5], 4
      %s151 = int_to_ptr.vmem [resolvable:$true] %s150
      %156 = dma.vmem_to_hbm [thread:$0]  %s151, 128, %s1, [#allocation4], 32, 32, 2
    $region13: #{tpu_custom_call.1} parent=1 // pred_fallthru
      _
    // Predicated region
    $region14: #{tpu_custom_call.1} parent=1 // pred_check
      _
    $region15: #{tpu_custom_call.1} parent=1 // pred_check_branch
      %158 = sbr.rel (0) target = $region17
    $region16: #{tpu_custom_call.1} parent=1 // pred_region
      %159 = dma.done [#allocation4], 128
    $region17: #{tpu_custom_call.1} parent=1 // pred_fallthru
      _
    %160 = vsyncpa [#allocation3], 1
    %161 = vsyncpa [#allocation4], 1

</llo_original>
